<compile_context>
chip_gen: v7x
topology: tpu7x:2x2x1
jax: 0.10.0
libtpu: 0.0.40
codegen_flags: <defaults>
</compile_context>

<pallas_src>
import functools
import math

import jax
import jax.numpy as jnp
from jax.experimental import pallas as pl
from jax.experimental.pallas import tpu as pltpu


# ----------------------------------------------------------------------------
# Pallas kernels
# ----------------------------------------------------------------------------
def mlp_fused_kernel(x_ref, w1t_ref, b1_ref, w2row_ref, b2_ref, o_ref):
    """Fused 2-layer MLP tile: o = ((x @ W1^T + b1) * w2_row).sum(-1) + b2.

    x_ref:     (bm, F)    input rows (bf16 or f32)
    w1t_ref:   (F,  Hp)   W1^T, hidden dim zero-padded to 128 lanes
    b1_ref:    (1,  Hp)   b1 (f32), zero-padded
    w2row_ref: (1,  Hp)   W2 row (f32), zero-padded
    b2_ref:    (1,  1)    b2 (f32)
    o_ref:     (bm, 1)    output

    Stage 1 runs on the MXU with f32 accumulation; the 2F-wide intermediate
    never leaves VMEM/vregs. Stage 2 is a VPU multiply + lane reduce (XLU),
    avoiding a lane-padded second matmul and a 128x-too-wide output.
    """
    y1 = jnp.dot(x_ref[...], w1t_ref[...],
                 preferred_element_type=jnp.float32) + b1_ref[...]
    y2 = jnp.sum(y1 * w2row_ref[...], axis=-1, keepdims=True) + b2_ref[...]
    o_ref[...] = y2.astype(o_ref.dtype)


def gemv_kernel(x_ref, weff_ref, beff_ref, o_ref):
    """Folded single-linear tile: o = (x * w_eff).sum(-1) + b_eff.

    Valid because the reference module has no activation between its Linears.
    """
    o_ref[...] = (jnp.sum(x_ref[...] * weff_ref[...], axis=-1, keepdims=True)
                  + beff_ref[...]).astype(o_ref.dtype)


# ----------------------------------------------------------------------------
# Parameter init (matches PyTorch nn.Linear default U(-1/sqrt(fan_in), ...))
# ----------------------------------------------------------------------------
def init_params(key, n_features):
    n_hidden = 2 * n_features
    k1 = 1.0 / math.sqrt(n_features)
    k2 = 1.0 / math.sqrt(n_hidden)
    ks = jax.random.split(key, 4)
    w1 = jax.random.uniform(ks[0], (n_hidden, n_features), jnp.float32, -k1, k1)
    b1 = jax.random.uniform(ks[1], (n_hidden,), jnp.float32, -k1, k1)
    w2 = jax.random.uniform(ks[2], (1, n_hidden), jnp.float32, -k2, k2)
    b2 = jax.random.uniform(ks[3], (1,), jnp.float32, -k2, k2)
    return {"w1": w1, "b1": b1, "w2": w2, "b2": b2}


# ----------------------------------------------------------------------------
# One-time packing (hoisted out of the hot path)
# ----------------------------------------------------------------------------
def _round_up(x, m):
    return ((x + m - 1) // m) * m


def pack_params(params, compute_dtype=jnp.bfloat16):
    """Transpose + zero-pad weights once; call this at init, not per forward.

    W1^T is cast to `compute_dtype` (bf16 default: MXU-native, half the VMEM /
    HBM). Bias/w2-row stay f32 since they participate in f32 accumulation.
    """
    n_hidden, n_features = params["w1"].shape
    Hp = _round_up(n_hidden, 128)
    w1t = (jnp.zeros((n_features, Hp), compute_dtype)
           .at[:, :n_hidden].set(params["w1"].T.astype(compute_dtype)))
    b1p = (jnp.zeros((1, Hp), jnp.float32)
           .at[:, :n_hidden].set(params["b1"][None, :]))
    w2row = (jnp.zeros((1, Hp), jnp.float32)
             .at[:, :n_hidden].set(params["w2"].astype(jnp.float32)))
    b2 = params["b2"].reshape(1, 1).astype(jnp.float32)
    return {"w1t": w1t, "b1": b1p, "w2row": w2row, "b2": b2}


def pack_params_folded(params):
    """Exact algebraic fold (module has no activation between the Linears):
    y = (x @ W1^T + b1) @ W2^T + b2 = x @ (W2 @ W1)^T + (W2 @ b1 + b2).
    """
    w_eff = (params["w2"] @ params["w1"]).astype(jnp.float32)       # (1, F)
    b_eff = (params["w2"] @ params["b1"] + params["b2"]).reshape(1, 1)
    return {"w_eff": w_eff, "b_eff": b_eff.astype(jnp.float32)}


# ----------------------------------------------------------------------------
# Tiling / VMEM helpers
# ----------------------------------------------------------------------------
def _choose_bm(M, block_m):
    """Row-tile size: sublane-aligned; multiple of 128 and >= 2 grid steps
    (v7x megacore) once M is large enough."""
    if M <= 128:
        return _round_up(max(M, 1), 8)
    bm = min(block_m, _round_up(M, 128))
    if _round_up(M, bm) // bm < 2:                 # keep >= 2 steps for megacore
        bm = max(128, _round_up((M + 1) // 2, 128))
    return bm


def _vmem_limit_bytes(bm, n_features, Hp, compute_dtype):
    itm = jnp.dtype(compute_dtype).itemsize
    weights = 2 * (n_features * Hp * itm + 2 * Hp * 4 + 4)   # double-buffered invariants
    io = 2 * (bm * n_features * itm + bm * 4)                # double-buffered x / out tiles
    inter = bm * Hp * 4                                      # f32 hidden intermediate
    need = weights + io + inter + (4 << 20)                  # headroom
    # Never lower the platform default (16/32 MiB); cap well below big-chip VMEM.
    return int(min(max(need, 32 * 1024 * 1024), 100 * 1024 * 1024))


# ----------------------------------------------------------------------------
# Forward wrappers
# ----------------------------------------------------------------------------
def mclassifier_forward(x, packed, block_m=512):
    """Faithful fused Linear->Linear forward. x: (..., F) -> (..., 1)."""
    n_features, Hp = packed["w1t"].shape
    orig_lead = x.shape[:-1]
    assert x.shape[-1] == n_features

    x_flat = x.reshape(-1, n_features).astype(packed["w1t"].dtype)
    M = x_flat.shape[0]
    bm = _choose_bm(M, block_m)
    Mp = _round_up(M, bm)
    if Mp != M:                                   # rows only; no lane padding of x
        x_flat = jnp.pad(x_flat, ((0, Mp - M), (0, 0)))

    out = pl.pallas_call(
        mlp_fused_kernel,
        out_shape=jax.ShapeDtypeStruct((Mp, 1), jnp.float32),
        grid_spec=pltpu.PrefetchScalarGridSpec(
            num_scalar_prefetch=0,
            grid=(Mp // bm,),
            in_specs=[
                pl.BlockSpec((bm, n_features), lambda i: (i, 0)),   # x rows
                pl.BlockSpec((n_features, Hp), lambda i: (0, 0)),   # W1^T (resident)
                pl.BlockSpec((1, Hp), lambda i: (0, 0)),            # b1
                pl.BlockSpec((1, Hp), lambda i: (0, 0)),            # w2 row
                pl.BlockSpec((1, 1), lambda i: (0, 0)),             # b2
            ],
            out_specs=pl.BlockSpec((bm, 1), lambda i: (i, 0)),
        ),
        compiler_params=pltpu.CompilerParams(
            dimension_semantics=("parallel",),
            vmem_limit_bytes=_vmem_limit_bytes(bm, n_features, Hp,
                                               packed["w1t"].dtype)),
    )(x_flat, packed["w1t"], packed["b1"], packed["w2row"], packed["b2"])

    return out[:M].reshape(orig_lead + (1,))


def mclassifier_forward_folded(x, folded, block_m=1024):
    """Folded single-GEMV forward (exact since the module has no activation)."""
    w_eff, b_eff = folded["w_eff"], folded["b_eff"]
    n_features = w_eff.shape[1]
    orig_lead = x.shape[:-1]
    assert x.shape[-1] == n_features

    x_flat = x.reshape(-1, n_features).astype(w_eff.dtype)
    M = x_flat.shape[0]
    bm = _choose_bm(M, block_m)
    Mp = _round_up(M, bm)
    if Mp != M:
        x_flat = jnp.pad(x_flat, ((0, Mp - M), (0, 0)))

    out = pl.pallas_call(
        gemv_kernel,
        out_shape=jax.ShapeDtypeStruct((Mp, 1), jnp.float32),
        grid_spec=pltpu.PrefetchScalarGridSpec(
            num_scalar_prefetch=0,
            grid=(Mp // bm,),
            in_specs=[
                pl.BlockSpec((bm, n_features), lambda i: (i, 0)),   # x rows
                pl.BlockSpec((1, n_features), lambda i: (0, 0)),    # w_eff row
                pl.BlockSpec((1, 1), lambda i: (0, 0)),             # b_eff
            ],
            out_specs=pl.BlockSpec((bm, 1), lambda i: (i, 0)),
        ),
        compiler_params=pltpu.CompilerParams(
            dimension_semantics=("parallel",)),
    )(x_flat, w_eff, b_eff)

    return out[:M].reshape(orig_lead + (1,))


# ----------------------------------------------------------------------------
# Demo
# ----------------------------------------------------------------------------
if __name__ == "__main__":
    B, N_FEATURES = 8, 32

    root = jax.random.PRNGKey(0)
    k_x, k_p = jax.random.split(root)
    x = jax.random.normal(k_x, (B, N_FEATURES), dtype=jnp.float32)
    params = init_params(k_p, N_FEATURES)

    # Pure-JAX reference (same math as the PyTorch forward).
    y1_ref = x @ params["w1"].T + params["b1"][None, :]
    y_ref = y1_ref @ params["w2"].T + params["b2"][None, :]

    # 1) Faithful fused kernel, f32 MXU operands (tight numerics vs PyTorch).
    packed_f32 = pack_params(params, compute_dtype=jnp.float32)
    fwd = jax.jit(functools.partial(mclassifier_forward, block_m=512))
    y_f32 = fwd(x, packed_f32)
    jax.block_until_ready(y_f32)
    assert y_f32.shape == (B, 1), y_f32.shape
    assert jnp.all(jnp.isfinite(y_f32))
    assert jnp.allclose(y_f32, y_ref, atol=1e-5, rtol=1e-5)

    # 2) Same kernel, bf16 MXU operands + f32 accumulation (production default).
    packed_bf16 = pack_params(params, compute_dtype=jnp.bfloat16)
    y_bf16 = fwd(x, packed_bf16)
    jax.block_until_ready(y_bf16)
    assert jnp.allclose(y_bf16, y_ref, atol=3e-2, rtol=3e-2)

    # 3) Folded single-GEMV kernel (exact algebraic fold; no activation in spec).
    folded = pack_params_folded(params)
    y_fold = jax.jit(mclassifier_forward_folded)(x, folded)
    jax.block_until_ready(y_fold)
    assert jnp.allclose(y_fold, y_ref, atol=1e-4, rtol=1e-4)

    print("KERNEL_OK")
</pallas_src>

<mosaic_0001>
module attributes {stable_mosaic.version = 11 : i64} {
  func.func @mlp_fused_kernel(%arg0: i32, %arg1: memref<8x32xf32, #tpu.memory_space<vmem>>, %arg2: memref<32x128xf32, #tpu.memory_space<vmem>>, %arg3: memref<1x128xf32, #tpu.memory_space<vmem>>, %arg4: memref<1x128xf32, #tpu.memory_space<vmem>>, %arg5: memref<1x1xf32, #tpu.memory_space<vmem>>, %arg6: memref<8x1xf32, #tpu.memory_space<vmem>>) attributes {dimension_semantics = [#tpu.dimension_semantics<parallel>], iteration_bounds = array<i64: 1>, scalar_prefetch = 0 : i64, scratch_operands = 0 : i64, tpu.core_type = #tpu.core_type<tc>, window_params = [{transform_indices = @transform_0, window_bounds = array<i64: 8, 32>}, {pipeline_mode = #tpu.pipeline_mode<synchronous>, transform_indices = @transform_1, window_bounds = array<i64: 32, 128>}, {pipeline_mode = #tpu.pipeline_mode<synchronous>, transform_indices = @transform_2, window_bounds = array<i64: 1, 128>}, {pipeline_mode = #tpu.pipeline_mode<synchronous>, transform_indices = @transform_3, window_bounds = array<i64: 1, 128>}, {pipeline_mode = #tpu.pipeline_mode<synchronous>, transform_indices = @transform_4, window_bounds = array<i64: 1, 1>}, {transform_indices = @transform_5, window_bounds = array<i64: 8, 1>}]} {
    %c0 = arith.constant 0 : index
    %c0_0 = arith.constant 0 : index
    %0 = vector.load %arg1[%c0, %c0_0] : memref<8x32xf32, #tpu.memory_space<vmem>>, vector<8x32xf32>
    %c0_1 = arith.constant 0 : index
    %c0_2 = arith.constant 0 : index
    %1 = vector.load %arg2[%c0_1, %c0_2] : memref<32x128xf32, #tpu.memory_space<vmem>>, vector<32x128xf32>
    %cst = arith.constant dense<0.000000e+00> : vector<8x128xf32>
    %2 = tpu.matmul %0, %1, %cst {dimension_numbers = #tpu.dot_dimension_numbers<[1], [0], [0], [1], [0, 0, 1, 1], [], []>} : vector<8x32xf32>, vector<32x128xf32>, vector<8x128xf32> -> vector<8x128xf32>
    %c0_3 = arith.constant 0 : index
    %c0_4 = arith.constant 0 : index
    %3 = vector.load %arg3[%c0_3, %c0_4] : memref<1x128xf32, #tpu.memory_space<vmem>>, vector<1x128xf32>
    %4 = vector.broadcast %3 : vector<1x128xf32> to vector<8x128xf32>
    %5 = arith.addf %2, %4 : vector<8x128xf32>
    %c0_5 = arith.constant 0 : index
    %c0_6 = arith.constant 0 : index
    %6 = vector.load %arg4[%c0_5, %c0_6] : memref<1x128xf32, #tpu.memory_space<vmem>>, vector<1x128xf32>
    %7 = vector.broadcast %6 : vector<1x128xf32> to vector<8x128xf32>
    %8 = arith.mulf %5, %7 : vector<8x128xf32>
    %cst_7 = arith.constant dense<0.000000e+00> : vector<8xf32>
    %9 = vector.multi_reduction <add>, %8, %cst_7 [1] : vector<8x128xf32> to vector<8xf32>
    %10 = vector.shape_cast %9 : vector<8xf32> to vector<8x1xf32>
    %c0_8 = arith.constant 0 : index
    %c0_9 = arith.constant 0 : index
    %11 = vector.load %arg5[%c0_8, %c0_9] : memref<1x1xf32, #tpu.memory_space<vmem>>, vector<1x1xf32>
    %12 = vector.broadcast %11 : vector<1x1xf32> to vector<8x1xf32>
    %13 = arith.addf %10, %12 : vector<8x1xf32>
    %c0_10 = arith.constant 0 : index
    %c0_11 = arith.constant 0 : index
    %14 = vector.load %arg6[%c0_10, %c0_11] : memref<8x1xf32, #tpu.memory_space<vmem>>, vector<8x1xf32>
    tpu.vector_store %arg6[%c0_10, %c0_11], %13 {strides = array<i32>} : memref<8x1xf32, #tpu.memory_space<vmem>>, vector<8x1xf32>,
    return
  }
  func.func @transform_0(%arg0: i32) -> (i32, i32) {
    %c0_i32 = arith.constant 0 : i32
    %c0_i32_0 = arith.constant 0 : i32
    return %arg0, %c0_i32 : i32, i32
  }
  func.func @transform_1(%arg0: i32) -> (i32, i32) {
    %c0_i32 = arith.constant 0 : i32
    %c0_i32_0 = arith.constant 0 : i32
    %c0_i32_1 = arith.constant 0 : i32
    return %c0_i32, %c0_i32_0 : i32, i32
  }
  func.func @transform_2(%arg0: i32) -> (i32, i32) {
    %c0_i32 = arith.constant 0 : i32
    %c0_i32_0 = arith.constant 0 : i32
    %c0_i32_1 = arith.constant 0 : i32
    return %c0_i32, %c0_i32_0 : i32, i32
  }
  func.func @transform_3(%arg0: i32) -> (i32, i32) {
    %c0_i32 = arith.constant 0 : i32
    %c0_i32_0 = arith.constant 0 : i32
    %c0_i32_1 = arith.constant 0 : i32
    return %c0_i32, %c0_i32_0 : i32, i32
  }
  func.func @transform_4(%arg0: i32) -> (i32, i32) {
    %c0_i32 = arith.constant 0 : i32
    %c0_i32_0 = arith.constant 0 : i32
    %c0_i32_1 = arith.constant 0 : i32
    return %c0_i32, %c0_i32_0 : i32, i32
  }
  func.func @transform_5(%arg0: i32) -> (i32, i32) {
    %c0_i32 = arith.constant 0 : i32
    %c0_i32_0 = arith.constant 0 : i32
    return %arg0, %c0_i32 : i32, i32
  }
}

</mosaic_0001>

<llo_original>
// kernel: mclassifier_forward.1
$region0: #{mclassifier_forward.1}
  #allocation0 [shape = 'u32[]', space=smem, size = 0x4, offset = 0x4, fixed_abs, tag = 'smem constant byte address 0x4 - core index']
  #allocation1 [shape = 'u32[144,128]{1,0:T(1,128)}', space=vmem, size = 0x12000, scoped, tag = 'internal scratch']
  #allocation2 [shape = 'f32[1,1]{1,0:T(1,128)S(1)}', space=vmem, size = 0x200, scoped, tag = 'scoped memory for mclassifier_forward.1']
  %s0 = inlined_call_operand.hbm [shape: f32[8,32], index: 0, kind: input, shape index: {}]
  %s1 = inlined_call_operand.hbm [shape: f32[32,128], index: 1, kind: input, shape index: {}]
  %s2 = inlined_call_operand.vmem [shape: f32[1,128], index: 2, kind: input, shape index: {}]
  %s3 = inlined_call_operand.vmem [shape: f32[1,128], index: 3, kind: input, shape index: {}]
  %s4 = inlined_call_operand.<no memory space> [shape: f32[1,1], index: 4, kind: input, shape index: {}]
  %s5 = inlined_call_operand.vmem [shape: f32[8,1], index: 5, kind: output, shape index: {}]
  %s6 = sld [smem:[#allocation0]]
  $region38: #{mclassifier_forward.1} parent=0
    _
  %s8 = ssub.s32 1, %s6
  %s9 = scalar_select 0, %s8, %s6
  %v10 = vstv %s4
  %11 = vst [vmem:[#allocation2] sm:$0x1] %v10
  $region1: #{mclassifier_forward.1} parent=0
    #allocation3 [shape = 'u8[4096]{0}', space=vmem, size = 0x1000, scoped, tag = 'input window, operand 0, single buffered']
    #allocation4 [shape = 's32[1]{0}', space=sflag, size = 0x4, scoped, tag = 'scoped memory for mclassifier_forward.1']
    #allocation5 [shape = 'u8[16384]{0}', space=vmem, size = 0x4000, scoped, tag = 'input window, operand 1, single buffered']
    #allocation6 [shape = 's32[1]{0}', space=sflag, size = 0x4, scoped, tag = 'scoped memory for mclassifier_forward.1']
    %12 = vsyncpa [#allocation4], 0
    %13 = vsyncpa [#allocation6], 0
    // Predicated region
    $region2: #{mclassifier_forward.1} parent=1 // pred_check
      _
    $region3: #{mclassifier_forward.1} parent=1 // pred_check_branch
      %15 = sbr.rel (0) target = $region5
    $region4: #{mclassifier_forward.1} parent=1 // pred_region
      %s17 = ssub.s32 128, 128
      %18 = vsyncadd [#allocation4], %s17
      %s20 = sshll.u32 [#allocation3], 4
      %s21 = int_to_ptr.vmem [resolvable:$true] %s20
      %23 = dma.hbm_to_vmem [thread:$0]  %s0, 128, %s21, [#allocation4]
    $region5: #{mclassifier_forward.1} parent=1 // pred_fallthru
      _
    // Predicated region
    $region6: #{mclassifier_forward.1} parent=1 // pred_check
      _
    $region7: #{mclassifier_forward.1} parent=1 // pred_check_branch
      %25 = sbr.rel (0) target = $region9
    $region8: #{mclassifier_forward.1} parent=1 // pred_region
      %s27 = ssub.s32 512, 512
      %28 = vsyncadd [#allocation6], %s27
      %s29 = sshll.u32 [#allocation5], 4
      %s30 = int_to_ptr.vmem [resolvable:$true] %s29
      %35 = dma.hbm_to_vmem [thread:$0]  %s1, 512, %s30, [#allocation6], 128, 128, 8
    $region9: #{mclassifier_forward.1} parent=1 // pred_fallthru
      _
    // Predicated region
    $region10: #{mclassifier_forward.1} parent=1 // pred_check
      _
    $region11: #{mclassifier_forward.1} parent=1 // pred_check_branch
      %37 = sbr.rel (0) target = $region13
    $region12: #{mclassifier_forward.1} parent=1 // pred_region
      _
    $region13: #{mclassifier_forward.1} parent=1 // pred_fallthru
      _
    // Predicated region
    $region14: #{mclassifier_forward.1} parent=1 // pred_check
      _
    $region15: #{mclassifier_forward.1} parent=1 // pred_check_branch
      %39 = sbr.rel (0) target = $region17
    $region16: #{mclassifier_forward.1} parent=1 // pred_region
      _
    $region17: #{mclassifier_forward.1} parent=1 // pred_fallthru
      _
    // Predicated region
    $region18: #{mclassifier_forward.1} parent=1 // pred_check
      _
    $region19: #{mclassifier_forward.1} parent=1 // pred_check_branch
      %41 = sbr.rel (0) target = $region21
    $region20: #{mclassifier_forward.1} parent=1 // pred_region
      _
    $region21: #{mclassifier_forward.1} parent=1 // pred_fallthru
      _
    // Predicated region
    $region22: #{mclassifier_forward.1} parent=1 // pred_check
      _
    $region23: #{mclassifier_forward.1} parent=1 // pred_check_branch
      %43 = sbr.rel (0) target = $region25
    $region24: #{mclassifier_forward.1} parent=1 // pred_region
      %44 = dma.done [#allocation4], 128
    $region25: #{mclassifier_forward.1} parent=1 // pred_fallthru
      _
    // Predicated region
    $region26: #{mclassifier_forward.1} parent=1 // pred_check
      _
    $region27: #{mclassifier_forward.1} parent=1 // pred_check_branch
      %46 = sbr.rel (0) target = $region29
    $region28: #{mclassifier_forward.1} parent=1 // pred_region
      %47 = dma.done [#allocation6], 512
    $region29: #{mclassifier_forward.1} parent=1 // pred_fallthru
      _
    %v48 = vld [vmem:[#allocation3] sm:$0xff]
    %v49 = vld [vmem:[#allocation5] sm:$0xff]
    %v50 = vld [vmem:[#allocation5 + $0x8] sm:$0xff]
    %v51 = vld [vmem:[#allocation5 + $0x10] sm:$0xff]
    %v52 = vld [vmem:[#allocation5 + $0x18] sm:$0xff]
    %v53 = vld [vmem:[%s2] sm:$0x1]
    %v55 = vlaneseq
    %v56 = vshrl.u32 %v55, 7
    %v57 = vsub.s32 0, %v56
    %v58 = vrot.slane %v53, %v57
    %vm60 = vcmask 261120
    %v62 = vsel %vm60, %v48, 0
    %64 = vmatprep.subr.mxu0 0.0
    %65 = vmatpush1.msra.mxu0 %v49
    %66 = vmatprep.subr.mxu0 0.0
    %67 = vmatpush1.msra.mxu0 %v50
    %68 = vmatprep.subr.mxu0 0.0
    %69 = vmatpush1.msra.mxu0 %v51
    %70 = vmatprep.subr.mxu0 0.0
    %71 = vmatpush1.msra.mxu0 %v52
    %72 = vmatprep.subr.mxu0 0.0
    %73 = vmatpush1.msra.mxu0 0.0
    %74 = vmatprep.subr.mxu0 0.0
    %75 = vmatpush1.msra.mxu0 0.0
    %76 = vmatprep.subr.mxu0 0.0
    %77 = vmatpush1.msra.mxu0 0.0
    %78 = vmatprep.subr.mxu0 0.0
    %79 = vmatpush1.msra.mxu0 0.0
    %80 = vmatprep.subr.mxu0 0.0
    %81 = vmatpush1.msra.mxu0 0.0
    %82 = vmatprep.subr.mxu0 0.0
    %83 = vmatpush1.msra.mxu0 0.0
    %84 = vmatprep.subr.mxu0 0.0
    %85 = vmatpush1.msra.mxu0 0.0
    %86 = vmatprep.subr.mxu0 0.0
    %87 = vmatpush1.msra.mxu0 0.0
    %88 = vmatprep.subr.mxu0 0.0
    %89 = vmatpush1.msra.mxu0 0.0
    %90 = vmatprep.subr.mxu0 0.0
    %91 = vmatpush1.msra.mxu0 0.0
    %92 = vmatprep.subr.mxu0 0.0
    %93 = vmatpush1.msra.mxu0 0.0
    %94 = vmatprep.subr.mxu0 0.0
    %95 = vmatpush1.msra.mxu0 0.0
    %96 = vmatprep.subr.mxu0 0.0
    %97 = vmatpush1.msra.mxu0 0.0
    %98 = vmatprep.subr.mxu0 0.0
    %99 = vmatpush1.msra.mxu0 0.0
    %100 = vmatprep.subr.mxu0 0.0
    %101 = vmatpush1.msra.mxu0 0.0
    %102 = vmatprep.subr.mxu0 0.0
    %103 = vmatpush1.msra.mxu0 0.0
    %104 = vmatprep.subr.mxu0 0.0
    %105 = vmatpush1.msra.mxu0 0.0
    %106 = vmatprep.subr.mxu0 0.0
    %107 = vmatpush1.msra.mxu0 0.0
    %108 = vmatprep.subr.mxu0 0.0
    %109 = vmatpush1.msra.mxu0 0.0
    %110 = vmatprep.subr.mxu0 0.0
    %111 = vmatpush1.msra.mxu0 0.0
    %112 = vmatprep.subr.mxu0 0.0
    %113 = vmatpush1.msra.mxu0 0.0
    %114 = vmatprep.subr.mxu0 0.0
    %115 = vmatpush1.msra.mxu0 0.0
    %116 = vmatprep.subr.mxu0 0.0
    %117 = vmatpush1.msra.mxu0 0.0
    %118 = vmatprep.subr.mxu0 0.0
    %119 = vmatpush1.msra.mxu0 0.0
    %120 = vmatprep.subr.mxu0 0.0
    %121 = vmatpush1.msra.mxu0 0.0
    %122 = vmatprep.subr.mxu0 0.0
    %123 = vmatpush1.msra.mxu0 0.0
    %124 = vmatprep.subr.mxu0 0.0
    %125 = vmatpush1.msra.mxu0 0.0
    %126 = vmatprep.subr.mxu0 0.0
    %127 = vmatpush1.msra.mxu0 0.0
    %128 = vmatprep.mubr.f32.mxu0 0.0
    %129 = vmatmul.mubr.f32.gmra.mrb[0].mxu0 %v62
    %v130 = vpop.f32.mrb[0].mxu0
    %v131 = vadd.f32 %v58, %v130
    %v132 = vpop.f32.mrb[0].mxu0
    %133 = vdwg.mxu0
    %v134 = vld [vmem:[%s3] sm:$0x1]
    %v136 = vlaneseq
    %v137 = vshrl.u32 %v136, 7
    %v138 = vsub.s32 0, %v137
    %v139 = vrot.slane %v134, %v138
    %v141 = vmul.f32 %v131, %v139
    %142 = vadd.xlane.f32.xlu0 %v141
    %v143 = vpop.xlane.xlu0 %142
    %v144 = vld [vmem:[#allocation2] sm:$0x1]
    %v146 = vlaneseq
    %v147 = vshrl.u32 %v146, 7
    %v148 = vsub.s32 0, %v147
    %v149 = vrot.slane %v144, %v148
    %v151 = vadd.f32 %v143, %v149
    %vm152 = vcmask 7168
    %153 = vst.msk [vmem:[%s5] sm:$0xff] %vm152, %v151
    // Predicated region
    $region30: #{mclassifier_forward.1} parent=1 // pred_check
      _
    $region31: #{mclassifier_forward.1} parent=1 // pred_check_branch
      %155 = sbr.rel (0) target = $region33
    $region32: #{mclassifier_forward.1} parent=1 // pred_region
      _
    $region33: #{mclassifier_forward.1} parent=1 // pred_fallthru
      _
    // Predicated region
    $region34: #{mclassifier_forward.1} parent=1 // pred_check
      _
    $region35: #{mclassifier_forward.1} parent=1 // pred_check_branch
      %157 = sbr.rel (0) target = $region37
    $region36: #{mclassifier_forward.1} parent=1 // pred_region
      _
    $region37: #{mclassifier_forward.1} parent=1 // pred_fallthru
      _
    %158 = vsyncpa [#allocation4], 1
    %159 = vsyncpa [#allocation6], 1

</llo_original>
